<compile_context>
chip_gen: v7x
topology: tpu7x:2x2x1
jax: 0.10.0
libtpu: 0.0.40
codegen_flags: <defaults>
</compile_context>

<pallas_src>
import jax
import jax.numpy as jnp
from jax.experimental import pallas as pl
from jax.experimental.pallas import tpu as pltpu

K = 28 * 28   # 784
H = 256
N_RAW = 10
N_PAD = 128   # lane-dense output tile


def _round_up(x, m):
    return (x + m - 1) // m * m


def mlp_kernel(x_ref, w1_ref, b1_ref, w2_ref, b2_ref, w3_ref, b3_ref, o_ref):
    # x arrives as f32 straight from HBM; cast to bf16 in-kernel.
    x = x_ref[...].astype(jnp.bfloat16)

    # Layer 1: Linear(784 -> 256) + ReLU. bf16 operands, f32 MXU accumulation.
    h1 = jnp.dot(x, w1_ref[...], preferred_element_type=jnp.float32)
    h1 = jnp.maximum(h1 + b1_ref[...], 0.0)

    # Layer 2: Linear(256 -> 256) + ReLU.
    h2 = jnp.dot(h1.astype(jnp.bfloat16), w2_ref[...],
                 preferred_element_type=jnp.float32)
    h2 = jnp.maximum(h2 + b2_ref[...], 0.0)

    # Layer 3: Linear(256 -> 128 padded) + Sigmoid (only lanes 0..9 are real).
    logits = jnp.dot(h2.astype(jnp.bfloat16), w3_ref[...],
                     preferred_element_type=jnp.float32)
    o_ref[...] = jax.nn.sigmoid(logits + b3_ref[...]).astype(o_ref.dtype)


def prepare_params(params):
    """One-time weight/bias padding + bf16 casting (hoisted out of the hot path)."""
    w1, b1, w2, b2, w3, b3 = params
    w1_p = w1.astype(jnp.bfloat16)                                   # (784, 256)
    w2_p = w2.astype(jnp.bfloat16)                                   # (256, 256)
    w3_p = jnp.zeros((H, N_PAD), jnp.bfloat16).at[:, :N_RAW].set(
        w3.astype(jnp.bfloat16))                                     # (256, 128)
    # Biases stay f32 (added after the f32 accumulation), 2-D on the lane axis.
    b1_p = b1.reshape(1, H).astype(jnp.float32)
    b2_p = b2.reshape(1, H).astype(jnp.float32)
    b3_p = jnp.zeros((1, N_PAD), jnp.float32).at[0, :N_RAW].set(
        b3.astype(jnp.float32))
    return (w1_p, b1_p, w2_p, b2_p, w3_p, b3_p)


def image_classifier_forward(x_nchw, prepared_params, *, tm=1024):
    """x_nchw: (B, 1, 28, 28) float32. Returns (B, 10) float32."""
    w1_p, b1_p, w2_p, b2_p, w3_p, b3_p = prepared_params
    B = x_nchw.shape[0]

    # nn.Flatten() on contiguous NCHW == row-major reshape. Keep f32, no K pad.
    x = x_nchw.reshape(B, K)

    # Minimal batch padding: sublane multiple (8) only, NOT a multiple of TM.
    B8 = _round_up(B, 8)
    if B8 != B:
        x = jnp.pad(x, ((0, B8 - B), (0, 0)))

    # Batch tile: large (amortize per-step overhead), capped so the grid keeps
    # >= 2 steps when possible (v7x has 2 TensorCores sharding the parallel axis).
    TM = min(tm, B8)
    if B8 >= 16:
        TM = min(TM, _round_up((B8 + 1) // 2, 16))
    TM = max(8, _round_up(TM, 8))

    grid_m = pl.cdiv(B8, TM)   # trailing block may be partial (OOB writes dropped)

    flops = 2 * B8 * (K * H + H * H + H * N_RAW)
    bytes_accessed = (B8 * K * 4                          # x, f32
                      + (K * H + H * H + H * N_PAD) * 2   # bf16 weights
                      + (2 * H + N_PAD) * 4               # f32 biases
                      + B8 * N_PAD * 2)                   # bf16 output
    cost = pl.CostEstimate(flops=flops,
                           transcendentals=B8 * N_RAW,
                           bytes_accessed=bytes_accessed)

    out = pl.pallas_call(
        mlp_kernel,
        out_shape=jax.ShapeDtypeStruct((B8, N_PAD), jnp.bfloat16),
        grid_spec=pl.GridSpec(
            grid=(grid_m,),
            in_specs=[
                pl.BlockSpec((TM, K), lambda i: (i, 0)),      # x: tiled over batch
                pl.BlockSpec((K, H), lambda i: (0, 0)),       # w1: resident
                pl.BlockSpec((1, H), lambda i: (0, 0)),       # b1
                pl.BlockSpec((H, H), lambda i: (0, 0)),       # w2
                pl.BlockSpec((1, H), lambda i: (0, 0)),       # b2
                pl.BlockSpec((H, N_PAD), lambda i: (0, 0)),   # w3
                pl.BlockSpec((1, N_PAD), lambda i: (0, 0)),   # b3
            ],
            out_specs=pl.BlockSpec((TM, N_PAD), lambda i: (i, 0)),
        ),
        compiler_params=pltpu.CompilerParams(
            dimension_semantics=("parallel",),
        ),
        cost_estimate=cost,
    )(x, w1_p, b1_p, w2_p, b2_p, w3_p, b3_p)

    return out[:B, :N_RAW].astype(jnp.float32)


def init_params(key):
    """Deterministic init mimicking torch.nn.Linear default (U[-1/sqrt(fan_in), +])."""
    def linear(key, fan_in, fan_out):
        kw, kb = jax.random.split(key)
        bound = 1.0 / jnp.sqrt(jnp.float32(fan_in))
        w = jax.random.uniform(kw, (fan_in, fan_out), jnp.float32, -bound, bound)
        b = jax.random.uniform(kb, (fan_out,), jnp.float32, -bound, bound)
        return w, b

    k1, k2, k3 = jax.random.split(key, 3)
    w1, b1 = linear(k1, K, H)
    w2, b2 = linear(k2, H, H)
    w3, b3 = linear(k3, H, N_RAW)
    return (w1, b1, w2, b2, w3, b3)


def reference_forward(x_nchw, params):
    """Pure-JAX f32 reference (matches the PyTorch module)."""
    w1, b1, w2, b2, w3, b3 = params
    x = x_nchw.reshape(x_nchw.shape[0], -1)
    h1 = jnp.maximum(x @ w1 + b1, 0.0)
    h2 = jnp.maximum(h1 @ w2 + b2, 0.0)
    return jax.nn.sigmoid(h2 @ w3 + b3)


if __name__ == "__main__":
    key = jax.random.PRNGKey(0)
    kx, kp = jax.random.split(key)

    B = 2
    x = jax.random.normal(kx, (B, 1, 28, 28), jnp.float32)  # NCHW, like MNIST
    params = init_params(kp)
    prepared = prepare_params(params)   # one-time pad/cast, reused across calls

    out = image_classifier_forward(x, prepared)
    out = jax.block_until_ready(out)

    ref = reference_forward(x, params)
    assert out.shape == (B, N_RAW)
    # bf16 matmul operands + bf16 output store (f32 accumulate) -> loosened tolerance.
    assert jnp.allclose(out, ref, atol=2e-2, rtol=2e-2), "mismatch vs JAX reference"

    print("KERNEL_OK")
</pallas_src>

<mosaic_0001>
module attributes {stable_mosaic.version = 11 : i64} {
  func.func @mlp_kernel(%arg0: i32, %arg1: memref<8x784xf32, #tpu.memory_space<vmem>>, %arg2: memref<784x256xbf16, #tpu.memory_space<vmem>>, %arg3: memref<1x256xf32, #tpu.memory_space<vmem>>, %arg4: memref<256x256xbf16, #tpu.memory_space<vmem>>, %arg5: memref<1x256xf32, #tpu.memory_space<vmem>>, %arg6: memref<256x128xbf16, #tpu.memory_space<vmem>>, %arg7: memref<1x128xf32, #tpu.memory_space<vmem>>, %arg8: memref<8x128xbf16, #tpu.memory_space<vmem>>) attributes {dimension_semantics = [#tpu.dimension_semantics<parallel>], iteration_bounds = array<i64: 1>, scalar_prefetch = 0 : i64, scratch_operands = 0 : i64, tpu.core_type = #tpu.core_type<tc>, window_params = [{transform_indices = @transform_0, window_bounds = array<i64: 8, 784>}, {pipeline_mode = #tpu.pipeline_mode<synchronous>, transform_indices = @transform_1, window_bounds = array<i64: 784, 256>}, {pipeline_mode = #tpu.pipeline_mode<synchronous>, transform_indices = @transform_2, window_bounds = array<i64: 1, 256>}, {pipeline_mode = #tpu.pipeline_mode<synchronous>, transform_indices = @transform_3, window_bounds = array<i64: 256, 256>}, {pipeline_mode = #tpu.pipeline_mode<synchronous>, transform_indices = @transform_4, window_bounds = array<i64: 1, 256>}, {pipeline_mode = #tpu.pipeline_mode<synchronous>, transform_indices = @transform_5, window_bounds = array<i64: 256, 128>}, {pipeline_mode = #tpu.pipeline_mode<synchronous>, transform_indices = @transform_6, window_bounds = array<i64: 1, 128>}, {transform_indices = @transform_7, window_bounds = array<i64: 8, 128>}]} {
    %c0 = arith.constant 0 : index
    %c0_0 = arith.constant 0 : index
    %0 = vector.load %arg1[%c0, %c0_0] : memref<8x784xf32, #tpu.memory_space<vmem>>, vector<8x784xf32>
    %1 = arith.truncf %0 : vector<8x784xf32> to vector<8x784xbf16>
    %c0_1 = arith.constant 0 : index
    %c0_2 = arith.constant 0 : index
    %2 = vector.load %arg2[%c0_1, %c0_2] : memref<784x256xbf16, #tpu.memory_space<vmem>>, vector<784x256xbf16>
    %cst = arith.constant dense<0.000000e+00> : vector<8x256xf32>
    %3 = tpu.matmul %1, %2, %cst {dimension_numbers = #tpu.dot_dimension_numbers<[1], [0], [0], [1], [0, 0, 1, 1], [], []>} : vector<8x784xbf16>, vector<784x256xbf16>, vector<8x256xf32> -> vector<8x256xf32>
    %c0_3 = arith.constant 0 : index
    %c0_4 = arith.constant 0 : index
    %4 = vector.load %arg3[%c0_3, %c0_4] : memref<1x256xf32, #tpu.memory_space<vmem>>, vector<1x256xf32>
    %5 = vector.broadcast %4 : vector<1x256xf32> to vector<8x256xf32>
    %6 = arith.addf %3, %5 : vector<8x256xf32>
    %cst_5 = arith.constant 0.000000e+00 : f32
    %7 = vector.broadcast %cst_5 : f32 to vector<8x256xf32>
    %8 = arith.maximumf %6, %7 : vector<8x256xf32>
    %9 = arith.truncf %8 : vector<8x256xf32> to vector<8x256xbf16>
    %c0_6 = arith.constant 0 : index
    %c0_7 = arith.constant 0 : index
    %10 = vector.load %arg4[%c0_6, %c0_7] : memref<256x256xbf16, #tpu.memory_space<vmem>>, vector<256x256xbf16>
    %cst_8 = arith.constant dense<0.000000e+00> : vector<8x256xf32>
    %11 = tpu.matmul %9, %10, %cst_8 {dimension_numbers = #tpu.dot_dimension_numbers<[1], [0], [0], [1], [0, 0, 1, 1], [], []>} : vector<8x256xbf16>, vector<256x256xbf16>, vector<8x256xf32> -> vector<8x256xf32>
    %c0_9 = arith.constant 0 : index
    %c0_10 = arith.constant 0 : index
    %12 = vector.load %arg5[%c0_9, %c0_10] : memref<1x256xf32, #tpu.memory_space<vmem>>, vector<1x256xf32>
    %13 = vector.broadcast %12 : vector<1x256xf32> to vector<8x256xf32>
    %14 = arith.addf %11, %13 : vector<8x256xf32>
    %cst_11 = arith.constant 0.000000e+00 : f32
    %15 = vector.broadcast %cst_11 : f32 to vector<8x256xf32>
    %16 = arith.maximumf %14, %15 : vector<8x256xf32>
    %17 = arith.truncf %16 : vector<8x256xf32> to vector<8x256xbf16>
    %c0_12 = arith.constant 0 : index
    %c0_13 = arith.constant 0 : index
    %18 = vector.load %arg6[%c0_12, %c0_13] : memref<256x128xbf16, #tpu.memory_space<vmem>>, vector<256x128xbf16>
    %cst_14 = arith.constant dense<0.000000e+00> : vector<8x128xf32>
    %19 = tpu.matmul %17, %18, %cst_14 {dimension_numbers = #tpu.dot_dimension_numbers<[1], [0], [0], [1], [0, 0, 1, 1], [], []>} : vector<8x256xbf16>, vector<256x128xbf16>, vector<8x128xf32> -> vector<8x128xf32>
    %c0_15 = arith.constant 0 : index
    %c0_16 = arith.constant 0 : index
    %20 = vector.load %arg7[%c0_15, %c0_16] : memref<1x128xf32, #tpu.memory_space<vmem>>, vector<1x128xf32>
    %21 = vector.broadcast %20 : vector<1x128xf32> to vector<8x128xf32>
    %22 = arith.addf %19, %21 : vector<8x128xf32>
    %23 = arith.negf %22 : vector<8x128xf32>
    %24 = math.exp %23 : vector<8x128xf32>
    %cst_17 = arith.constant 1.000000e+00 : f32
    %25 = vector.broadcast %cst_17 : f32 to vector<8x128xf32>
    %26 = arith.addf %25, %24 : vector<8x128xf32>
    %27 = arith.divf %25, %26 : vector<8x128xf32>
    %28 = arith.truncf %27 : vector<8x128xf32> to vector<8x128xbf16>
    %c0_18 = arith.constant 0 : index
    %c0_19 = arith.constant 0 : index
    %29 = vector.load %arg8[%c0_18, %c0_19] : memref<8x128xbf16, #tpu.memory_space<vmem>>, vector<8x128xbf16>
    tpu.vector_store %arg8[%c0_18, %c0_19], %28 {strides = array<i32>} : memref<8x128xbf16, #tpu.memory_space<vmem>>, vector<8x128xbf16>,
    return
  }
  func.func @transform_0(%arg0: i32) -> (i32, i32) {
    %c0_i32 = arith.constant 0 : i32
    %c0_i32_0 = arith.constant 0 : i32
    return %arg0, %c0_i32 : i32, i32
  }
  func.func @transform_1(%arg0: i32) -> (i32, i32) {
    %c0_i32 = arith.constant 0 : i32
    %c0_i32_0 = arith.constant 0 : i32
    %c0_i32_1 = arith.constant 0 : i32
    return %c0_i32, %c0_i32_0 : i32, i32
  }
  func.func @transform_2(%arg0: i32) -> (i32, i32) {
    %c0_i32 = arith.constant 0 : i32
    %c0_i32_0 = arith.constant 0 : i32
    %c0_i32_1 = arith.constant 0 : i32
    return %c0_i32, %c0_i32_0 : i32, i32
  }
  func.func @transform_3(%arg0: i32) -> (i32, i32) {
    %c0_i32 = arith.constant 0 : i32
    %c0_i32_0 = arith.constant 0 : i32
    %c0_i32_1 = arith.constant 0 : i32
    return %c0_i32, %c0_i32_0 : i32, i32
  }
  func.func @transform_4(%arg0: i32) -> (i32, i32) {
    %c0_i32 = arith.constant 0 : i32
    %c0_i32_0 = arith.constant 0 : i32
    %c0_i32_1 = arith.constant 0 : i32
    return %c0_i32, %c0_i32_0 : i32, i32
  }
  func.func @transform_5(%arg0: i32) -> (i32, i32) {
    %c0_i32 = arith.constant 0 : i32
    %c0_i32_0 = arith.constant 0 : i32
    %c0_i32_1 = arith.constant 0 : i32
    return %c0_i32, %c0_i32_0 : i32, i32
  }
  func.func @transform_6(%arg0: i32) -> (i32, i32) {
    %c0_i32 = arith.constant 0 : i32
    %c0_i32_0 = arith.constant 0 : i32
    %c0_i32_1 = arith.constant 0 : i32
    return %c0_i32, %c0_i32_0 : i32, i32
  }
  func.func @transform_7(%arg0: i32) -> (i32, i32) {
    %c0_i32 = arith.constant 0 : i32
    %c0_i32_0 = arith.constant 0 : i32
    return %arg0, %c0_i32 : i32, i32
  }
}

</mosaic_0001>

<llo_original>
// kernel: tpu_custom_call.1
$region0: #{tpu_custom_call.1}
  #allocation0 [shape = 'u32[]', space=smem, size = 0x4, offset = 0x4, fixed_abs, tag = 'smem constant byte address 0x4 - core index']
  #allocation1 [shape = 'u32[144,128]{1,0:T(1,128)}', space=vmem, size = 0x12000, scoped, tag = 'internal scratch']
  %s0 = inlined_call_operand.hbm [shape: f32[8,784], index: 0, kind: input, shape index: {}]
  %s1 = inlined_call_operand.hbm [shape: bf16[784,256], index: 1, kind: input, shape index: {}]
  %s2 = inlined_call_operand.vmem [shape: f32[1,256], index: 2, kind: input, shape index: {}]
  %s3 = inlined_call_operand.hbm [shape: bf16[256,256], index: 3, kind: input, shape index: {}]
  %s4 = inlined_call_operand.vmem [shape: f32[1,256], index: 4, kind: input, shape index: {}]
  %s5 = inlined_call_operand.hbm [shape: bf16[256,128], index: 5, kind: input, shape index: {}]
  %s6 = inlined_call_operand.vmem [shape: f32[1,128], index: 6, kind: input, shape index: {}]
  %s7 = inlined_call_operand.hbm [shape: bf16[8,128], index: 7, kind: output, shape index: {}]
  %s8 = sld [smem:[#allocation0]]
  $region54: #{tpu_custom_call.1} parent=0
    _
  %s10 = ssub.s32 1, %s8
  %s11 = scalar_select 0, %s10, %s8
  $region1: #{tpu_custom_call.1} parent=0
    #allocation2 [shape = 'u8[28672]{0}', space=vmem, size = 0x7000, scoped, tag = 'input window, operand 0, single buffered']
    #allocation3 [shape = 's32[1]{0}', space=sflag, size = 0x4, scoped, tag = 'scoped memory for tpu_custom_call.1']
    #allocation4 [shape = 's32[1]{0}', space=sflag, size = 0x4, scoped, tag = 'scoped memory for tpu_custom_call.1']
    #allocation5 [shape = 'u8[401408]{0}', space=vmem, size = 0x62000, scoped, tag = 'input window, operand 1, single buffered']
    #allocation6 [shape = 's32[1]{0}', space=sflag, size = 0x4, scoped, tag = 'scoped memory for tpu_custom_call.1']
    #allocation7 [shape = 'u8[131072]{0}', space=vmem, size = 0x20000, scoped, tag = 'input window, operand 3, single buffered']
    #allocation8 [shape = 'u8[65536]{0}', space=vmem, size = 0x10000, scoped, tag = 'input window, operand 5, single buffered']
    #allocation9 [shape = 's32[1]{0}', space=sflag, size = 0x4, scoped, tag = 'scoped memory for tpu_custom_call.1']
    #allocation10 [shape = 'u8[2048]{0}', space=vmem, size = 0x800, scoped, tag = 'output window, operand 0, single buffered']
    %12 = vsyncpa [#allocation3], 0
    %13 = vsyncpa [#allocation6], 0
    %14 = vsyncpa [#allocation9], 0
    %15 = vsyncpa [#allocation4], 0
    // Predicated region
    $region2: #{tpu_custom_call.1} parent=1 // pred_check
      _
    $region3: #{tpu_custom_call.1} parent=1 // pred_check_branch
      %17 = sbr.rel (0) target = $region5
    $region4: #{tpu_custom_call.1} parent=1 // pred_region
      %s19 = ssub.s32 896, 896
      %20 = vsyncadd [#allocation3], %s19
      %s22 = sshll.u32 [#allocation2], 4
      %s23 = int_to_ptr.vmem [resolvable:$true] %s22
      %25 = dma.hbm_to_vmem [thread:$0]  %s0, 896, %s23, [#allocation3]
    $region5: #{tpu_custom_call.1} parent=1 // pred_fallthru
      _
    // Predicated region
    $region6: #{tpu_custom_call.1} parent=1 // pred_check
      _
    $region7: #{tpu_custom_call.1} parent=1 // pred_check_branch
      %27 = sbr.rel (0) target = $region9
    $region8: #{tpu_custom_call.1} parent=1 // pred_region
      %s29 = ssub.s32 12544, 12544
      %30 = vsyncadd [#allocation6], %s29
      %s31 = sshll.u32 [#allocation5], 4
      %s32 = int_to_ptr.vmem [resolvable:$true] %s31
      %37 = dma.hbm_to_vmem [thread:$0]  %s1, 12544, %s32, [#allocation6], 128, 128, 8
    $region9: #{tpu_custom_call.1} parent=1 // pred_fallthru
      _
    // Predicated region
    $region10: #{tpu_custom_call.1} parent=1 // pred_check
      _
    $region11: #{tpu_custom_call.1} parent=1 // pred_check_branch
      %39 = sbr.rel (0) target = $region13
    $region12: #{tpu_custom_call.1} parent=1 // pred_region
      _
    $region13: #{tpu_custom_call.1} parent=1 // pred_fallthru
      _
    // Predicated region
    $region14: #{tpu_custom_call.1} parent=1 // pred_check
      _
    $region15: #{tpu_custom_call.1} parent=1 // pred_check_branch
      %41 = sbr.rel (0) target = $region17
    $region16: #{tpu_custom_call.1} parent=1 // pred_region
      %s43 = ssub.s32 4096, 4096
      %44 = vsyncadd [#allocation6], %s43
      %s45 = sshll.u32 [#allocation7], 4
      %s46 = int_to_ptr.vmem [resolvable:$true] %s45
      %51 = dma.hbm_to_vmem [thread:$0]  %s3, 4096, %s46, [#allocation6], 128, 128, 8
    $region17: #{tpu_custom_call.1} parent=1 // pred_fallthru
      _
    // Predicated region
    $region18: #{tpu_custom_call.1} parent=1 // pred_check
      _
    $region19: #{tpu_custom_call.1} parent=1 // pred_check_branch
      %53 = sbr.rel (0) target = $region21
    $region20: #{tpu_custom_call.1} parent=1 // pred_region
      _
    $region21: #{tpu_custom_call.1} parent=1 // pred_fallthru
      _
    // Predicated region
    $region22: #{tpu_custom_call.1} parent=1 // pred_check
      _
    $region23: #{tpu_custom_call.1} parent=1 // pred_check_branch
      %55 = sbr.rel (0) target = $region25
    $region24: #{tpu_custom_call.1} parent=1 // pred_region
      %s57 = ssub.s32 2048, 2048
      %58 = vsyncadd [#allocation9], %s57
      %s59 = sshll.u32 [#allocation8], 4
      %s60 = int_to_ptr.vmem [resolvable:$true] %s59
      %65 = dma.hbm_to_vmem [thread:$0]  %s5, 2048, %s60, [#allocation9], 64, 64, 4
    $region25: #{tpu_custom_call.1} parent=1 // pred_fallthru
      _
    // Predicated region
    $region26: #{tpu_custom_call.1} parent=1 // pred_check
      _
    $region27: #{tpu_custom_call.1} parent=1 // pred_check_branch
      %67 = sbr.rel (0) target = $region29
    $region28: #{tpu_custom_call.1} parent=1 // pred_region
      _
    $region29: #{tpu_custom_call.1} parent=1 // pred_fallthru
      _
    // Predicated region
    $region30: #{tpu_custom_call.1} parent=1 // pred_check
      _
    $region31: #{tpu_custom_call.1} parent=1 // pred_check_branch
      %69 = sbr.rel (0) target = $region33
    $region32: #{tpu_custom_call.1} parent=1 // pred_region
      %70 = dma.done [#allocation3], 896
    $region33: #{tpu_custom_call.1} parent=1 // pred_fallthru
      _
    // Predicated region
    $region34: #{tpu_custom_call.1} parent=1 // pred_check
      _
    $region35: #{tpu_custom_call.1} parent=1 // pred_check_branch
      %72 = sbr.rel (0) target = $region37
    $region36: #{tpu_custom_call.1} parent=1 // pred_region
      %73 = dma.done [#allocation6], 12544
    $region37: #{tpu_custom_call.1} parent=1 // pred_fallthru
      _
    // Predicated region
    $region38: #{tpu_custom_call.1} parent=1 // pred_check
      _
    $region39: #{tpu_custom_call.1} parent=1 // pred_check_branch
      %75 = sbr.rel (0) target = $region41
    $region40: #{tpu_custom_call.1} parent=1 // pred_region
      %76 = dma.done [#allocation6], 4096
    $region41: #{tpu_custom_call.1} parent=1 // pred_fallthru
      _
    // Predicated region
    $region42: #{tpu_custom_call.1} parent=1 // pred_check
      _
    $region43: #{tpu_custom_call.1} parent=1 // pred_check_branch
      %78 = sbr.rel (0) target = $region45
    $region44: #{tpu_custom_call.1} parent=1 // pred_region
      %79 = dma.done [#allocation9], 2048
    $region45: #{tpu_custom_call.1} parent=1 // pred_fallthru
      _
    %v81 = vld [vmem:[#allocation2] sm:$0xff]
    %v82 = vld [vmem:[#allocation2 + $0x8] sm:$0xff]
    %v83 = vld [vmem:[#allocation2 + $0x10] sm:$0xff]
    %v84 = vld [vmem:[#allocation2 + $0x18] sm:$0xff]
    %v85 = vld [vmem:[#allocation2 + $0x20] sm:$0xff]
    %v86 = vld [vmem:[#allocation2 + $0x28] sm:$0xff]
    %v87 = vld [vmem:[#allocation2 + $0x30] sm:$0xff]
    %v88 = vpack.c.bf16 %v81, %v81
    %v89 = vpack.c.bf16 %v82, %v82
    %v90 = vpack.c.bf16 %v83, %v83
    %v91 = vpack.c.bf16 %v84, %v84
    %v92 = vpack.c.bf16 %v85, %v85
    %v93 = vpack.c.bf16 %v86, %v86
    %v94 = vpack.c.bf16 %v87, %v87
    %v95 = vld [vmem:[#allocation5] sm:$0xff]
    %v96 = vld [vmem:[#allocation5 + $0x8] sm:$0xff]
    %v97 = vld [vmem:[#allocation5 + $0x10] sm:$0xff]
    %v98 = vld [vmem:[#allocation5 + $0x18] sm:$0xff]
    %v99 = vld [vmem:[#allocation5 + $0x20] sm:$0xff]
    %v100 = vld [vmem:[#allocation5 + $0x28] sm:$0xff]
    %v101 = vld [vmem:[#allocation5 + $0x30] sm:$0xff]
    %v102 = vld [vmem:[#allocation5 + $0x38] sm:$0xff]
    %v103 = vld [vmem:[#allocation5 + $0x40] sm:$0xff]
    %v104 = vld [vmem:[#allocation5 + $0x48] sm:$0xff]
    %v105 = vld [vmem:[#allocation5 + $0x50] sm:$0xff]
    %v106 = vld [vmem:[#allocation5 + $0x58] sm:$0xff]
    %v107 = vld [vmem:[#allocation5 + $0x60] sm:$0xff]
    %v108 = vld [vmem:[#allocation5 + $0x68] sm:$0xff]
    %v109 = vld [vmem:[#allocation5 + $0x70] sm:$0xff]
    %v110 = vld [vmem:[#allocation5 + $0x78] sm:$0xff]
    %v111 = vld [vmem:[#allocation5 + $0x80] sm:$0xff]
    %v112 = vld [vmem:[#allocation5 + $0x88] sm:$0xff]
    %v113 = vld [vmem:[#allocation5 + $0x90] sm:$0xff]
    %v114 = vld [vmem:[#allocation5 + $0x98] sm:$0xff]
    %v115 = vld [vmem:[#allocation5 + $0xa0] sm:$0xff]
    %v116 = vld [vmem:[#allocation5 + $0xa8] sm:$0xff]
    %v117 = vld [vmem:[#allocation5 + $0xb0] sm:$0xff]
    %v118 = vld [vmem:[#allocation5 + $0xb8] sm:$0xff]
    %v119 = vld [vmem:[#allocation5 + $0xc0] sm:$0xff]
    %v120 = vld [vmem:[#allocation5 + $0xc8] sm:$0xff]
    %v121 = vld [vmem:[#allocation5 + $0xd0] sm:$0xff]
    %v122 = vld [vmem:[#allocation5 + $0xd8] sm:$0xff]
    %v123 = vld [vmem:[#allocation5 + $0xe0] sm:$0xff]
    %v124 = vld [vmem:[#allocation5 + $0xe8] sm:$0xff]
    %v125 = vld [vmem:[#allocation5 + $0xf0] sm:$0xff]
    %v126 = vld [vmem:[#allocation5 + $0xf8] sm:$0xff]
    %v127 = vld [vmem:[#allocation5 + $0x100] sm:$0xff]
    %v128 = vld [vmem:[#allocation5 + $0x108] sm:$0xff]
    %v129 = vld [vmem:[#allocation5 + $0x110] sm:$0xff]
    %v130 = vld [vmem:[#allocation5 + $0x118] sm:$0xff]
    %v131 = vld [vmem:[#allocation5 + $0x120] sm:$0xff]
    %v132 = vld [vmem:[#allocation5 + $0x128] sm:$0xff]
    %v133 = vld [vmem:[#allocation5 + $0x130] sm:$0xff]
    %v134 = vld [vmem:[#allocation5 + $0x138] sm:$0xff]
    %v135 = vld [vmem:[#allocation5 + $0x140] sm:$0xff]
    %v136 = vld [vmem:[#allocation5 + $0x148] sm:$0xff]
    %v137 = vld [vmem:[#allocation5 + $0x150] sm:$0xff]
    %v138 = vld [vmem:[#allocation5 + $0x158] sm:$0xff]
    %v139 = vld [vmem:[#allocation5 + $0x160] sm:$0xff]
    %v140 = vld [vmem:[#allocation5 + $0x168] sm:$0xff]
    %v141 = vld [vmem:[#allocation5 + $0x170] sm:$0xff]
    %v142 = vld [vmem:[#allocation5 + $0x178] sm:$0xff]
    %v143 = vld [vmem:[#allocation5 + $0x180] sm:$0xff]
    %v144 = vld [vmem:[#allocation5 + $0x188] sm:$0xff]
    %v145 = vld [vmem:[#allocation5 + $0x190] sm:$0xff]
    %v146 = vld [vmem:[#allocation5 + $0x198] sm:$0xff]
    %v147 = vld [vmem:[#allocation5 + $0x1a0] sm:$0xff]
    %v148 = vld [vmem:[#allocation5 + $0x1a8] sm:$0xff]
    %v149 = vld [vmem:[#allocation5 + $0x1b0] sm:$0xff]
    %v150 = vld [vmem:[#allocation5 + $0x1b8] sm:$0xff]
    %v151 = vld [vmem:[#allocation5 + $0x1c0] sm:$0xff]
    %v152 = vld [vmem:[#allocation5 + $0x1c8] sm:$0xff]
    %v153 = vld [vmem:[#allocation5 + $0x1d0] sm:$0xff]
    %v154 = vld [vmem:[#allocation5 + $0x1d8] sm:$0xff]
    %v155 = vld [vmem:[#allocation5 + $0x1e0] sm:$0xff]
    %v156 = vld [vmem:[#allocation5 + $0x1e8] sm:$0xff]
    %v157 = vld [vmem:[#allocation5 + $0x1f0] sm:$0xff]
    %v158 = vld [vmem:[#allocation5 + $0x1f8] sm:$0xff]
    %v159 = vld [vmem:[#allocation5 + $0x200] sm:$0xff]
    %v160 = vld [vmem:[#allocation5 + $0x208] sm:$0xff]
    %v161 = vld [vmem:[#allocation5 + $0x210] sm:$0xff]
    %v162 = vld [vmem:[#allocation5 + $0x218] sm:$0xff]
    %v163 = vld [vmem:[#allocation5 + $0x220] sm:$0xff]
    %v164 = vld [vmem:[#allocation5 + $0x228] sm:$0xff]
    %v165 = vld [vmem:[#allocation5 + $0x230] sm:$0xff]
    %v166 = vld [vmem:[#allocation5 + $0x238] sm:$0xff]
    %v167 = vld [vmem:[#allocation5 + $0x240] sm:$0xff]
    %v168 = vld [vmem:[#allocation5 + $0x248] sm:$0xff]
    %v169 = vld [vmem:[#allocation5 + $0x250] sm:$0xff]
    %v170 = vld [vmem:[#allocation5 + $0x258] sm:$0xff]
    %v171 = vld [vmem:[#allocation5 + $0x260] sm:$0xff]
    %v172 = vld [vmem:[#allocation5 + $0x268] sm:$0xff]
    %v173 = vld [vmem:[#allocation5 + $0x270] sm:$0xff]
    %v174 = vld [vmem:[#allocation5 + $0x278] sm:$0xff]
    %v175 = vld [vmem:[#allocation5 + $0x280] sm:$0xff]
    %v176 = vld [vmem:[#allocation5 + $0x288] sm:$0xff]
    %v177 = vld [vmem:[#allocation5 + $0x290] sm:$0xff]
    %v178 = vld [vmem:[#allocation5 + $0x298] sm:$0xff]
    %v179 = vld [vmem:[#allocation5 + $0x2a0] sm:$0xff]
    %v180 = vld [vmem:[#allocation5 + $0x2a8] sm:$0xff]
    %v181 = vld [vmem:[#allocation5 + $0x2b0] sm:$0xff]
    %v182 = vld [vmem:[#allocation5 + $0x2b8] sm:$0xff]
    %v183 = vld [vmem:[#allocation5 + $0x2c0] sm:$0xff]
    %v184 = vld [vmem:[#allocation5 + $0x2c8] sm:$0xff]
    %v185 = vld [vmem:[#allocation5 + $0x2d0] sm:$0xff]
    %v186 = vld [vmem:[#allocation5 + $0x2d8] sm:$0xff]
    %v187 = vld [vmem:[#allocation5 + $0x2e0] sm:$0xff]
    %v188 = vld [vmem:[#allocation5 + $0x2e8] sm:$0xff]
    %v189 = vld [vmem:[#allocation5 + $0x2f0] sm:$0xff]
    %v190 = vld [vmem:[#allocation5 + $0x2f8] sm:$0xff]
    %v191 = vld [vmem:[#allocation5 + $0x300] sm:$0xff]
    %v192 = vld [vmem:[#allocation5 + $0x308] sm:$0xff]
    %v193 = vld [vmem:[%s2] sm:$0x3]
    %v195 = vlaneseq
    %v196 = vshrl.u32 %v195, 7
    %v197 = vsub.s32 0, %v196
    %v198 = vrot.slane %v193, %v197
    %v199 = vlaneseq
    %v200 = vshrl.u32 %v199, 7
    %v201 = vsub.s32 1, %v200
    %v202 = vrot.slane %v193, %v201
    %v303 = vunpack.c.l.b16 %v95
    %v304 = vunpack.c.h.b16 %v95
    %v305 = vunpack.c.l.b16 %v96
    %v306 = vunpack.c.h.b16 %v96
    %v307 = vunpack.c.l.b16 %v97
    %v308 = vunpack.c.h.b16 %v97
    %v309 = vunpack.c.l.b16 %v98
    %v310 = vunpack.c.h.b16 %v98
    %v311 = vunpack.c.l.b16 %v99
    %v312 = vunpack.c.h.b16 %v99
    %v313 = vunpack.c.l.b16 %v100
    %v314 = vunpack.c.h.b16 %v100
    %v315 = vunpack.c.l.b16 %v101
    %v316 = vunpack.c.h.b16 %v101
    %v317 = vunpack.c.l.b16 %v102
    %v318 = vunpack.c.h.b16 %v102
    %v319 = vunpack.c.l.b16 %v103
    %v320 = vunpack.c.h.b16 %v103
    %v321 = vunpack.c.l.b16 %v104
    %v322 = vunpack.c.h.b16 %v104
    %v323 = vunpack.c.l.b16 %v105
    %v324 = vunpack.c.h.b16 %v105
    %v325 = vunpack.c.l.b16 %v106
    %v326 = vunpack.c.h.b16 %v106
    %v327 = vunpack.c.l.b16 %v107
    %v328 = vunpack.c.h.b16 %v107
    %v329 = vunpack.c.l.b16 %v108
    %v330 = vunpack.c.h.b16 %v108
    %v331 = vunpack.c.l.b16 %v109
    %v332 = vunpack.c.h.b16 %v109
    %v333 = vunpack.c.l.b16 %v110
    %v334 = vunpack.c.h.b16 %v110
    %v335 = vunpack.c.l.b16 %v111
    %v336 = vunpack.c.h.b16 %v111
    %v337 = vunpack.c.l.b16 %v112
    %v338 = vunpack.c.h.b16 %v112
    %v339 = vunpack.c.l.b16 %v113
    %v340 = vunpack.c.h.b16 %v113
    %v341 = vunpack.c.l.b16 %v114
    %v342 = vunpack.c.h.b16 %v114
    %v343 = vunpack.c.l.b16 %v115
    %v344 = vunpack.c.h.b16 %v115
    %v345 = vunpack.c.l.b16 %v116
    %v346 = vunpack.c.h.b16 %v116
    %v347 = vunpack.c.l.b16 %v117
    %v348 = vunpack.c.h.b16 %v117
    %v349 = vunpack.c.l.b16 %v118
    %v350 = vunpack.c.h.b16 %v118
    %v351 = vunpack.c.l.b16 %v119
    %v352 = vunpack.c.h.b16 %v119
    %v353 = vunpack.c.l.b16 %v120
    %v354 = vunpack.c.h.b16 %v120
    %v355 = vunpack.c.l.b16 %v121
    %v356 = vunpack.c.h.b16 %v121
    %v357 = vunpack.c.l.b16 %v122
    %v358 = vunpack.c.h.b16 %v122
    %v359 = vunpack.c.l.b16 %v123
    %v360 = vunpack.c.h.b16 %v123
    %v361 = vunpack.c.l.b16 %v124
    %v362 = vunpack.c.h.b16 %v124
    %v363 = vunpack.c.l.b16 %v125
    %v364 = vunpack.c.h.b16 %v125
    %v365 = vunpack.c.l.b16 %v126
    %v366 = vunpack.c.h.b16 %v126
    %v367 = vunpack.c.l.b16 %v127
    %v368 = vunpack.c.h.b16 %v127
    %v369 = vunpack.c.l.b16 %v128
    %v370 = vunpack.c.h.b16 %v128
    %v371 = vunpack.c.l.b16 %v129
    %v372 = vunpack.c.h.b16 %v129
    %v373 = vunpack.c.l.b16 %v130
    %v374 = vunpack.c.h.b16 %v130
    %v375 = vunpack.c.l.b16 %v131
    %v376 = vunpack.c.h.b16 %v131
    %v377 = vunpack.c.l.b16 %v132
    %v378 = vunpack.c.h.b16 %v132
    %v379 = vunpack.c.l.b16 %v133
    %v380 = vunpack.c.h.b16 %v133
    %v381 = vunpack.c.l.b16 %v134
    %v382 = vunpack.c.h.b16 %v134
    %v383 = vunpack.c.l.b16 %v135
    %v384 = vunpack.c.h.b16 %v135
    %v385 = vunpack.c.l.b16 %v136
    %v386 = vunpack.c.h.b16 %v136
    %v387 = vunpack.c.l.b16 %v137
    %v388 = vunpack.c.h.b16 %v137
    %v389 = vunpack.c.l.b16 %v138
    %v390 = vunpack.c.h.b16 %v138
    %v391 = vunpack.c.l.b16 %v139
    %v392 = vunpack.c.h.b16 %v139
    %v393 = vunpack.c.l.b16 %v140
    %v394 = vunpack.c.h.b16 %v140
    %v395 = vunpack.c.l.b16 %v141
    %v396 = vunpack.c.h.b16 %v141
    %v397 = vunpack.c.l.b16 %v142
    %v398 = vunpack.c.h.b16 %v142
    %v399 = vunpack.c.l.b16 %v143
    %v400 = vunpack.c.h.b16 %v143
    %v401 = vunpack.c.l.b16 %v144
    %v402 = vunpack.c.h.b16 %v144
    %v403 = vunpack.c.l.b16 %v145
    %v404 = vunpack.c.h.b16 %v145
    %v405 = vunpack.c.l.b16 %v146
    %v406 = vunpack.c.h.b16 %v146
    %v407 = vunpack.c.l.b16 %v147
    %v408 = vunpack.c.h.b16 %v147
    %v409 = vunpack.c.l.b16 %v148
    %v410 = vunpack.c.h.b16 %v148
    %v411 = vunpack.c.l.b16 %v149
    %v412 = vunpack.c.h.b16 %v149
    %v413 = vunpack.c.l.b16 %v150
    %v414 = vunpack.c.h.b16 %v150
    %v415 = vunpack.c.l.b16 %v151
    %v416 = vunpack.c.h.b16 %v151
    %v417 = vunpack.c.l.b16 %v152
    %v418 = vunpack.c.h.b16 %v152
    %v419 = vunpack.c.l.b16 %v153
    %v420 = vunpack.c.h.b16 %v153
    %v421 = vunpack.c.l.b16 %v154
    %v422 = vunpack.c.h.b16 %v154
    %v423 = vunpack.c.l.b16 %v155
    %v424 = vunpack.c.h.b16 %v155
    %v425 = vunpack.c.l.b16 %v156
    %v426 = vunpack.c.h.b16 %v156
    %v427 = vunpack.c.l.b16 %v157
    %v428 = vunpack.c.h.b16 %v157
    %v429 = vunpack.c.l.b16 %v158
    %v430 = vunpack.c.h.b16 %v158
    %v431 = vunpack.c.l.b16 %v159
    %v432 = vunpack.c.h.b16 %v159
    %v433 = vunpack.c.l.b16 %v160
    %v434 = vunpack.c.h.b16 %v160
    %v435 = vunpack.c.l.b16 %v161
    %v436 = vunpack.c.h.b16 %v161
    %v437 = vunpack.c.l.b16 %v162
    %v438 = vunpack.c.h.b16 %v162
    %v439 = vunpack.c.l.b16 %v163
    %v440 = vunpack.c.h.b16 %v163
    %v441 = vunpack.c.l.b16 %v164
    %v442 = vunpack.c.h.b16 %v164
    %v443 = vunpack.c.l.b16 %v165
    %v444 = vunpack.c.h.b16 %v165
    %v445 = vunpack.c.l.b16 %v166
    %v446 = vunpack.c.h.b16 %v166
    %v447 = vunpack.c.l.b16 %v167
    %v448 = vunpack.c.h.b16 %v167
    %v449 = vunpack.c.l.b16 %v168
    %v450 = vunpack.c.h.b16 %v168
    %v451 = vunpack.c.l.b16 %v169
    %v452 = vunpack.c.h.b16 %v169
    %v453 = vunpack.c.l.b16 %v170
    %v454 = vunpack.c.h.b16 %v170
    %v455 = vunpack.c.l.b16 %v171
    %v456 = vunpack.c.h.b16 %v171
    %v457 = vunpack.c.l.b16 %v172
    %v458 = vunpack.c.h.b16 %v172
    %v459 = vunpack.c.l.b16 %v173
    %v460 = vunpack.c.h.b16 %v173
    %v461 = vunpack.c.l.b16 %v174
    %v462 = vunpack.c.h.b16 %v174
    %v463 = vunpack.c.l.b16 %v175
    %v464 = vunpack.c.h.b16 %v175
    %v465 = vunpack.c.l.b16 %v176
    %v466 = vunpack.c.h.b16 %v176
    %v467 = vunpack.c.l.b16 %v177
    %v468 = vunpack.c.h.b16 %v177
    %v469 = vunpack.c.l.b16 %v178
    %v470 = vunpack.c.h.b16 %v178
    %v471 = vunpack.c.l.b16 %v179
    %v472 = vunpack.c.h.b16 %v179
    %v473 = vunpack.c.l.b16 %v180
    %v474 = vunpack.c.h.b16 %v180
    %v475 = vunpack.c.l.b16 %v181
    %v476 = vunpack.c.h.b16 %v181
    %v477 = vunpack.c.l.b16 %v182
    %v478 = vunpack.c.h.b16 %v182
    %v479 = vunpack.c.l.b16 %v183
    %v480 = vunpack.c.h.b16 %v183
    %v481 = vunpack.c.l.b16 %v184
    %v482 = vunpack.c.h.b16 %v184
    %v483 = vunpack.c.l.b16 %v185
    %v484 = vunpack.c.h.b16 %v185
    %v485 = vunpack.c.l.b16 %v186
    %v486 = vunpack.c.h.b16 %v186
    %v487 = vunpack.c.l.b16 %v187
    %v488 = vunpack.c.h.b16 %v187
    %v489 = vunpack.c.l.b16 %v188
    %v490 = vunpack.c.h.b16 %v188
    %v491 = vunpack.c.l.b16 %v189
    %v492 = vunpack.c.h.b16 %v189
    %v493 = vunpack.c.l.b16 %v190
    %v494 = vunpack.c.h.b16 %v190
    %v495 = vunpack.c.l.b16 %v191
    %v496 = vunpack.c.h.b16 %v191
    %v497 = vunpack.c.l.b16 %v192
    %v498 = vunpack.c.h.b16 %v192
    %v499 = vpack.c.b16 %v305, %v303
    %v500 = vpack.c.b16 %v306, %v304
    %v501 = vpack.c.b16 %v309, %v307
    %v502 = vpack.c.b16 %v310, %v308
    %v503 = vpack.c.b16 %v313, %v311
    %v504 = vpack.c.b16 %v314, %v312
    %v505 = vpack.c.b16 %v317, %v315
    %v506 = vpack.c.b16 %v318, %v316
    %v507 = vpack.c.b16 %v321, %v319
    %v508 = vpack.c.b16 %v322, %v320
    %v509 = vpack.c.b16 %v325, %v323
    %v510 = vpack.c.b16 %v326, %v324
    %v511 = vpack.c.b16 %v329, %v327
    %v512 = vpack.c.b16 %v330, %v328
    %v513 = vpack.c.b16 %v333, %v331
    %v514 = vpack.c.b16 %v334, %v332
    %v515 = vpack.c.b16 %v337, %v335
    %v516 = vpack.c.b16 %v338, %v336
    %v517 = vpack.c.b16 %v341, %v339
    %v518 = vpack.c.b16 %v342, %v340
    %v519 = vpack.c.b16 %v345, %v343
    %v520 = vpack.c.b16 %v346, %v344
    %v521 = vpack.c.b16 %v349, %v347
    %v522 = vpack.c.b16 %v350, %v348
    %v523 = vpack.c.b16 %v353, %v351
    %v524 = vpack.c.b16 %v354, %v352
    %v525 = vpack.c.b16 %v357, %v355
    %v526 = vpack.c.b16 %v358, %v356
    %v527 = vpack.c.b16 %v361, %v359
    %v528 = vpack.c.b16 %v362, %v360
    %v529 = vpack.c.b16 %v365, %v363
    %v530 = vpack.c.b16 %v366, %v364
    %v531 = vpack.c.b16 %v369, %v367
    %v532 = vpack.c.b16 %v370, %v368
    %v533 = vpack.c.b16 %v373, %v371
    %v534 = vpack.c.b16 %v374, %v372
    %v535 = vpack.c.b16 %v377, %v375
    %v536 = vpack.c.b16 %v378, %v376
    %v537 = vpack.c.b16 %v381, %v379
    %v538 = vpack.c.b16 %v382, %v380
    %v539 = vpack.c.b16 %v385, %v383
    %v540 = vpack.c.b16 %v386, %v384
    %v541 = vpack.c.b16 %v389, %v387
    %v542 = vpack.c.b16 %v390, %v388
    %v543 = vpack.c.b16 %v393, %v391
    %v544 = vpack.c.b16 %v394, %v392
    %v545 = vpack.c.b16 %v397, %v395
    %v546 = vpack.c.b16 %v398, %v396
    %v547 = vpack.c.b16 %v401, %v399
    %v548 = vpack.c.b16 %v402, %v400
    %v549 = vpack.c.b16 %v405, %v403
    %v550 = vpack.c.b16 %v406, %v404
    %v551 = vpack.c.b16 %v409, %v407
    %v552 = vpack.c.b16 %v410, %v408
    %v553 = vpack.c.b16 %v413, %v411
    %v554 = vpack.c.b16 %v414, %v412
    %v555 = vpack.c.b16 %v417, %v415
    %v556 = vpack.c.b16 %v418, %v416
    %v557 = vpack.c.b16 %v421, %v419
    %v558 = vpack.c.b16 %v422, %v420
    %v559 = vpack.c.b16 %v425, %v423
    %v560 = vpack.c.b16 %v426, %v424
    %v561 = vpack.c.b16 %v429, %v427
    %v562 = vpack.c.b16 %v430, %v428
    %v563 = vpack.c.b16 %v433, %v431
    %v564 = vpack.c.b16 %v434, %v432
    %v565 = vpack.c.b16 %v437, %v435
    %v566 = vpack.c.b16 %v438, %v436
    %v567 = vpack.c.b16 %v441, %v439
    %v568 = vpack.c.b16 %v442, %v440
    %v569 = vpack.c.b16 %v445, %v443
    %v570 = vpack.c.b16 %v446, %v444
    %v571 = vpack.c.b16 %v449, %v447
    %v572 = vpack.c.b16 %v450, %v448
    %v573 = vpack.c.b16 %v453, %v451
    %v574 = vpack.c.b16 %v454, %v452
    %v575 = vpack.c.b16 %v457, %v455
    %v576 = vpack.c.b16 %v458, %v456
    %v577 = vpack.c.b16 %v461, %v459
    %v578 = vpack.c.b16 %v462, %v460
    %v579 = vpack.c.b16 %v465, %v463
    %v580 = vpack.c.b16 %v466, %v464
    %v581 = vpack.c.b16 %v469, %v467
    %v582 = vpack.c.b16 %v470, %v468
    %v583 = vpack.c.b16 %v473, %v471
    %v584 = vpack.c.b16 %v474, %v472
    %v585 = vpack.c.b16 %v477, %v475
    %v586 = vpack.c.b16 %v478, %v476
    %v587 = vpack.c.b16 %v481, %v479
    %v588 = vpack.c.b16 %v482, %v480
    %v589 = vpack.c.b16 %v485, %v483
    %v590 = vpack.c.b16 %v486, %v484
    %v591 = vpack.c.b16 %v489, %v487
    %v592 = vpack.c.b16 %v490, %v488
    %v593 = vpack.c.b16 %v493, %v491
    %v594 = vpack.c.b16 %v494, %v492
    %v595 = vpack.c.b16 %v497, %v495
    %v596 = vpack.c.b16 %v498, %v496
    %vm695 = vcmask 130048
    %v697 = vsel %vm695, %v94, 0
    %699 = vmatprep.subr.bf16.mxu0 %v500
    %700 = vmatpush1.bf16.msra.mxu0 %v499
    %701 = vmatprep.subr.bf16.mxu0 %v502
    %702 = vmatpush1.bf16.msra.mxu0 %v501
    %703 = vmatprep.subr.bf16.mxu0 %v504
    %704 = vmatpush1.bf16.msra.mxu0 %v503
    %705 = vmatprep.subr.bf16.mxu0 %v506
    %706 = vmatpush1.bf16.msra.mxu0 %v505
    %707 = vmatprep.subr.bf16.mxu0 %v508
    %708 = vmatpush1.bf16.msra.mxu0 %v507
    %709 = vmatprep.subr.bf16.mxu0 %v510
    %710 = vmatpush1.bf16.msra.mxu0 %v509
    %711 = vmatprep.subr.bf16.mxu0 %v512
    %712 = vmatpush1.bf16.msra.mxu0 %v511
    %713 = vmatprep.subr.bf16.mxu0 %v514
    %714 = vmatpush1.bf16.msra.mxu0 %v513
    %715 = vmatprep.subr.bf16.mxu0 %v516
    %716 = vmatpush1.bf16.msra.mxu0 %v515
    %717 = vmatprep.subr.bf16.mxu0 %v518
    %718 = vmatpush1.bf16.msra.mxu0 %v517
    %719 = vmatprep.subr.bf16.mxu0 %v520
    %720 = vmatpush1.bf16.msra.mxu0 %v519
    %721 = vmatprep.subr.bf16.mxu0 %v522
    %722 = vmatpush1.bf16.msra.mxu0 %v521
    %723 = vmatprep.subr.bf16.mxu0 %v524
    %724 = vmatpush1.bf16.msra.mxu0 %v523
    %725 = vmatprep.subr.bf16.mxu0 %v526
    %726 = vmatpush1.bf16.msra.mxu0 %v525
    %727 = vmatprep.subr.bf16.mxu0 %v528
    %728 = vmatpush1.bf16.msra.mxu0 %v527
    %729 = vmatprep.subr.bf16.mxu0 %v530
    %730 = vmatpush1.bf16.msra.mxu0 %v529
    %731 = vmatprep.mubr.bf16.mxu0 %v89
    %732 = vmatmul.mubr.bf16.gmra.mrb[0].mxu0 %v88
    %v733 = vpop.f32.mrb[0].mxu0
    %v734 = vadd.f32 %v198, %v733
    %v735 = vpop.f32.mrb[0].mxu0
    %v736 = vadd.f32 %v202, %v735
    %v737 = vpop.f32.mrb[0].mxu0
    %v738 = vpop.f32.mrb[0].mxu0
    %739 = vdwg.mxu0
    %740 = vmatprep.subr.bf16.mxu0 %v532
    %741 = vmatpush1.bf16.msra.mxu0 %v531
    %742 = vmatprep.subr.bf16.mxu0 %v534
    %743 = vmatpush1.bf16.msra.mxu0 %v533
    %744 = vmatprep.subr.bf16.mxu0 %v536
    %745 = vmatpush1.bf16.msra.mxu0 %v535
    %746 = vmatprep.subr.bf16.mxu0 %v538
    %747 = vmatpush1.bf16.msra.mxu0 %v537
    %748 = vmatprep.subr.bf16.mxu0 %v540
    %749 = vmatpush1.bf16.msra.mxu0 %v539
    %750 = vmatprep.subr.bf16.mxu0 %v542
    %751 = vmatpush1.bf16.msra.mxu0 %v541
    %752 = vmatprep.subr.bf16.mxu0 %v544
    %753 = vmatpush1.bf16.msra.mxu0 %v543
    %754 = vmatprep.subr.bf16.mxu0 %v546
    %755 = vmatpush1.bf16.msra.mxu0 %v545
    %756 = vmatprep.subr.bf16.mxu0 %v548
    %757 = vmatpush1.bf16.msra.mxu0 %v547
    %758 = vmatprep.subr.bf16.mxu0 %v550
    %759 = vmatpush1.bf16.msra.mxu0 %v549
    %760 = vmatprep.subr.bf16.mxu0 %v552
    %761 = vmatpush1.bf16.msra.mxu0 %v551
    %762 = vmatprep.subr.bf16.mxu0 %v554
    %763 = vmatpush1.bf16.msra.mxu0 %v553
    %764 = vmatprep.subr.bf16.mxu0 %v556
    %765 = vmatpush1.bf16.msra.mxu0 %v555
    %766 = vmatprep.subr.bf16.mxu0 %v558
    %767 = vmatpush1.bf16.msra.mxu0 %v557
    %768 = vmatprep.subr.bf16.mxu0 %v560
    %769 = vmatpush1.bf16.msra.mxu0 %v559
    %770 = vmatprep.subr.bf16.mxu0 %v562
    %771 = vmatpush1.bf16.msra.mxu0 %v561
    %772 = vmatprep.mubr.bf16.mxu0 %v91
    %773 = vmatmul.mubr.bf16.gmra.mrb[0].mxu0 %v90
    %v774 = vpop.f32.mrb[0].mxu0
    %v775 = vadd.f32 %v734, %v774
    %v776 = vpop.f32.mrb[0].mxu0
    %v777 = vadd.f32 %v736, %v776
    %v778 = vpop.f32.mrb[0].mxu0
    %v779 = vpop.f32.mrb[0].mxu0
    %780 = vdwg.mxu0
    %781 = vmatprep.subr.bf16.mxu0 %v564
    %782 = vmatpush1.bf16.msra.mxu0 %v563
    %783 = vmatprep.subr.bf16.mxu0 %v566
    %784 = vmatpush1.bf16.msra.mxu0 %v565
    %785 = vmatprep.subr.bf16.mxu0 %v568
    %786 = vmatpush1.bf16.msra.mxu0 %v567
    %787 = vmatprep.subr.bf16.mxu0 %v570
    %788 = vmatpush1.bf16.msra.mxu0 %v569
    %789 = vmatprep.subr.bf16.mxu0 %v572
    %790 = vmatpush1.bf16.msra.mxu0 %v571
    %791 = vmatprep.subr.bf16.mxu0 %v574
    %792 = vmatpush1.bf16.msra.mxu0 %v573
    %793 = vmatprep.subr.bf16.mxu0 %v576
    %794 = vmatpush1.bf16.msra.mxu0 %v575
    %795 = vmatprep.subr.bf16.mxu0 %v578
    %796 = vmatpush1.bf16.msra.mxu0 %v577
    %797 = vmatprep.subr.bf16.mxu0 %v580
    %798 = vmatpush1.bf16.msra.mxu0 %v579
    %799 = vmatprep.subr.bf16.mxu0 %v582
    %800 = vmatpush1.bf16.msra.mxu0 %v581
    %801 = vmatprep.subr.bf16.mxu0 %v584
    %802 = vmatpush1.bf16.msra.mxu0 %v583
    %803 = vmatprep.subr.bf16.mxu0 %v586
    %804 = vmatpush1.bf16.msra.mxu0 %v585
    %805 = vmatprep.subr.bf16.mxu0 %v588
    %806 = vmatpush1.bf16.msra.mxu0 %v587
    %807 = vmatprep.subr.bf16.mxu0 %v590
    %808 = vmatpush1.bf16.msra.mxu0 %v589
    %809 = vmatprep.subr.bf16.mxu0 %v592
    %810 = vmatpush1.bf16.msra.mxu0 %v591
    %811 = vmatprep.subr.bf16.mxu0 %v594
    %812 = vmatpush1.bf16.msra.mxu0 %v593
    %813 = vmatprep.mubr.bf16.mxu0 %v93
    %814 = vmatmul.mubr.bf16.gmra.mrb[0].mxu0 %v92
    %v815 = vpop.f32.mrb[0].mxu0
    %v816 = vadd.f32 %v775, %v815
    %v817 = vpop.f32.mrb[0].mxu0
    %v818 = vadd.f32 %v777, %v817
    %v819 = vpop.f32.mrb[0].mxu0
    %v820 = vpop.f32.mrb[0].mxu0
    %821 = vdwg.mxu0
    %822 = vmatprep.subr.bf16.mxu0 %v596
    %823 = vmatpush1.bf16.msra.mxu0 %v595
    %824 = vmatprep.subr.bf16.mxu0 0
    %825 = vmatpush1.bf16.msra.mxu0 0
    %826 = vmatprep.subr.bf16.mxu0 0
    %827 = vmatpush1.bf16.msra.mxu0 0
    %828 = vmatprep.subr.bf16.mxu0 0
    %829 = vmatpush1.bf16.msra.mxu0 0
    %830 = vmatprep.subr.bf16.mxu0 0
    %831 = vmatpush1.bf16.msra.mxu0 0
    %832 = vmatprep.subr.bf16.mxu0 0
    %833 = vmatpush1.bf16.msra.mxu0 0
    %834 = vmatprep.subr.bf16.mxu0 0
    %835 = vmatpush1.bf16.msra.mxu0 0
    %836 = vmatprep.subr.bf16.mxu0 0
    %837 = vmatpush1.bf16.msra.mxu0 0
    %838 = vmatprep.subr.bf16.mxu0 0
    %839 = vmatpush1.bf16.msra.mxu0 0
    %840 = vmatprep.subr.bf16.mxu0 0
    %841 = vmatpush1.bf16.msra.mxu0 0
    %842 = vmatprep.subr.bf16.mxu0 0
    %843 = vmatpush1.bf16.msra.mxu0 0
    %844 = vmatprep.subr.bf16.mxu0 0
    %845 = vmatpush1.bf16.msra.mxu0 0
    %846 = vmatprep.subr.bf16.mxu0 0
    %847 = vmatpush1.bf16.msra.mxu0 0
    %848 = vmatprep.subr.bf16.mxu0 0
    %849 = vmatpush1.bf16.msra.mxu0 0
    %850 = vmatprep.subr.bf16.mxu0 0
    %851 = vmatpush1.bf16.msra.mxu0 0
    %852 = vmatprep.subr.bf16.mxu0 0
    %853 = vmatpush1.bf16.msra.mxu0 0
    %854 = vmatprep.mubr.bf16.mxu0 0
    %855 = vmatmul.mubr.bf16.gmra.mrb[0].mxu0 %v697
    %v856 = vpop.f32.mrb[0].mxu0
    %v857 = vadd.f32 %v816, %v856
    %v858 = vpop.f32.mrb[0].mxu0
    %v859 = vadd.f32 %v818, %v858
    %v860 = vpop.f32.mrb[0].mxu0
    %v861 = vpop.f32.mrb[0].mxu0
    %862 = vdwg.mxu0
    %v863 = vmax.f32 %v857, 0.0
    %v864 = vmax.f32 %v859, 0.0
    %v865 = vpack.c.bf16 %v863, %v863
    %v866 = vpack.c.bf16 %v864, %v864
    %v867 = vld [vmem:[#allocation7] sm:$0xff]
    %v868 = vld [vmem:[#allocation7 + $0x8] sm:$0xff]
    %v869 = vld [vmem:[#allocation7 + $0x10] sm:$0xff]
    %v870 = vld [vmem:[#allocation7 + $0x18] sm:$0xff]
    %v871 = vld [vmem:[#allocation7 + $0x20] sm:$0xff]
    %v872 = vld [vmem:[#allocation7 + $0x28] sm:$0xff]
    %v873 = vld [vmem:[#allocation7 + $0x30] sm:$0xff]
    %v874 = vld [vmem:[#allocation7 + $0x38] sm:$0xff]
    %v875 = vld [vmem:[#allocation7 + $0x40] sm:$0xff]
    %v876 = vld [vmem:[#allocation7 + $0x48] sm:$0xff]
    %v877 = vld [vmem:[#allocation7 + $0x50] sm:$0xff]
    %v878 = vld [vmem:[#allocation7 + $0x58] sm:$0xff]
    %v879 = vld [vmem:[#allocation7 + $0x60] sm:$0xff]
    %v880 = vld [vmem:[#allocation7 + $0x68] sm:$0xff]
    %v881 = vld [vmem:[#allocation7 + $0x70] sm:$0xff]
    %v882 = vld [vmem:[#allocation7 + $0x78] sm:$0xff]
    %v883 = vld [vmem:[#allocation7 + $0x80] sm:$0xff]
    %v884 = vld [vmem:[#allocation7 + $0x88] sm:$0xff]
    %v885 = vld [vmem:[#allocation7 + $0x90] sm:$0xff]
    %v886 = vld [vmem:[#allocation7 + $0x98] sm:$0xff]
    %v887 = vld [vmem:[#allocation7 + $0xa0] sm:$0xff]
    %v888 = vld [vmem:[#allocation7 + $0xa8] sm:$0xff]
    %v889 = vld [vmem:[#allocation7 + $0xb0] sm:$0xff]
    %v890 = vld [vmem:[#allocation7 + $0xb8] sm:$0xff]
    %v891 = vld [vmem:[#allocation7 + $0xc0] sm:$0xff]
    %v892 = vld [vmem:[#allocation7 + $0xc8] sm:$0xff]
    %v893 = vld [vmem:[#allocation7 + $0xd0] sm:$0xff]
    %v894 = vld [vmem:[#allocation7 + $0xd8] sm:$0xff]
    %v895 = vld [vmem:[#allocation7 + $0xe0] sm:$0xff]
    %v896 = vld [vmem:[#allocation7 + $0xe8] sm:$0xff]
    %v897 = vld [vmem:[#allocation7 + $0xf0] sm:$0xff]
    %v898 = vld [vmem:[#allocation7 + $0xf8] sm:$0xff]
    %v899 = vld [vmem:[%s4] sm:$0x3]
    %v901 = vlaneseq
    %v902 = vshrl.u32 %v901, 7
    %v903 = vsub.s32 0, %v902
    %v904 = vrot.slane %v899, %v903
    %v905 = vlaneseq
    %v906 = vshrl.u32 %v905, 7
    %v907 = vsub.s32 1, %v906
    %v908 = vrot.slane %v899, %v907
    %v943 = vunpack.c.l.b16 %v867
    %v944 = vunpack.c.h.b16 %v867
    %v945 = vunpack.c.l.b16 %v868
    %v946 = vunpack.c.h.b16 %v868
    %v947 = vunpack.c.l.b16 %v869
    %v948 = vunpack.c.h.b16 %v869
    %v949 = vunpack.c.l.b16 %v870
    %v950 = vunpack.c.h.b16 %v870
    %v951 = vunpack.c.l.b16 %v871
    %v952 = vunpack.c.h.b16 %v871
    %v953 = vunpack.c.l.b16 %v872
    %v954 = vunpack.c.h.b16 %v872
    %v955 = vunpack.c.l.b16 %v873
    %v956 = vunpack.c.h.b16 %v873
    %v957 = vunpack.c.l.b16 %v874
    %v958 = vunpack.c.h.b16 %v874
    %v959 = vunpack.c.l.b16 %v875
    %v960 = vunpack.c.h.b16 %v875
    %v961 = vunpack.c.l.b16 %v876
    %v962 = vunpack.c.h.b16 %v876
    %v963 = vunpack.c.l.b16 %v877
    %v964 = vunpack.c.h.b16 %v877
    %v965 = vunpack.c.l.b16 %v878
    %v966 = vunpack.c.h.b16 %v878
    %v967 = vunpack.c.l.b16 %v879
    %v968 = vunpack.c.h.b16 %v879
    %v969 = vunpack.c.l.b16 %v880
    %v970 = vunpack.c.h.b16 %v880
    %v971 = vunpack.c.l.b16 %v881
    %v972 = vunpack.c.h.b16 %v881
    %v973 = vunpack.c.l.b16 %v882
    %v974 = vunpack.c.h.b16 %v882
    %v975 = vunpack.c.l.b16 %v883
    %v976 = vunpack.c.h.b16 %v883
    %v977 = vunpack.c.l.b16 %v884
    %v978 = vunpack.c.h.b16 %v884
    %v979 = vunpack.c.l.b16 %v885
    %v980 = vunpack.c.h.b16 %v885
    %v981 = vunpack.c.l.b16 %v886
    %v982 = vunpack.c.h.b16 %v886
    %v983 = vunpack.c.l.b16 %v887
    %v984 = vunpack.c.h.b16 %v887
    %v985 = vunpack.c.l.b16 %v888
    %v986 = vunpack.c.h.b16 %v888
    %v987 = vunpack.c.l.b16 %v889
    %v988 = vunpack.c.h.b16 %v889
    %v989 = vunpack.c.l.b16 %v890
    %v990 = vunpack.c.h.b16 %v890
    %v991 = vunpack.c.l.b16 %v891
    %v992 = vunpack.c.h.b16 %v891
    %v993 = vunpack.c.l.b16 %v892
    %v994 = vunpack.c.h.b16 %v892
    %v995 = vunpack.c.l.b16 %v893
    %v996 = vunpack.c.h.b16 %v893
    %v997 = vunpack.c.l.b16 %v894
    %v998 = vunpack.c.h.b16 %v894
    %v999 = vunpack.c.l.b16 %v895
    %v1000 = vunpack.c.h.b16 %v895
    %v1001 = vunpack.c.l.b16 %v896
    %v1002 = vunpack.c.h.b16 %v896
    %v1003 = vunpack.c.l.b16 %v897
    %v1004 = vunpack.c.h.b16 %v897
    %v1005 = vunpack.c.l.b16 %v898
    %v1006 = vunpack.c.h.b16 %v898
    %v1007 = vpack.c.b16 %v945, %v943
    %v1008 = vpack.c.b16 %v946, %v944
    %v1009 = vpack.c.b16 %v949, %v947
    %v1010 = vpack.c.b16 %v950, %v948
    %v1011 = vpack.c.b16 %v953, %v951
    %v1012 = vpack.c.b16 %v954, %v952
    %v1013 = vpack.c.b16 %v957, %v955
    %v1014 = vpack.c.b16 %v958, %v956
    %v1015 = vpack.c.b16 %v961, %v959
    %v1016 = vpack.c.b16 %v962, %v960
    %v1017 = vpack.c.b16 %v965, %v963
    %v1018 = vpack.c.b16 %v966, %v964
    %v1019 = vpack.c.b16 %v969, %v967
    %v1020 = vpack.c.b16 %v970, %v968
    %v1021 = vpack.c.b16 %v973, %v971
    %v1022 = vpack.c.b16 %v974, %v972
    %v1023 = vpack.c.b16 %v977, %v975
    %v1024 = vpack.c.b16 %v978, %v976
    %v1025 = vpack.c.b16 %v981, %v979
    %v1026 = vpack.c.b16 %v982, %v980
    %v1027 = vpack.c.b16 %v985, %v983
    %v1028 = vpack.c.b16 %v986, %v984
    %v1029 = vpack.c.b16 %v989, %v987
    %v1030 = vpack.c.b16 %v990, %v988
    %v1031 = vpack.c.b16 %v993, %v991
    %v1032 = vpack.c.b16 %v994, %v992
    %v1033 = vpack.c.b16 %v997, %v995
    %v1034 = vpack.c.b16 %v998, %v996
    %v1035 = vpack.c.b16 %v1001, %v999
    %v1036 = vpack.c.b16 %v1002, %v1000
    %v1037 = vpack.c.b16 %v1005, %v1003
    %v1038 = vpack.c.b16 %v1006, %v1004
    %1071 = vmatprep.subr.bf16.mxu0 %v1008
    %1072 = vmatpush1.bf16.msra.mxu0 %v1007
    %1073 = vmatprep.subr.bf16.mxu0 %v1010
    %1074 = vmatpush1.bf16.msra.mxu0 %v1009
    %1075 = vmatprep.subr.bf16.mxu0 %v1012
    %1076 = vmatpush1.bf16.msra.mxu0 %v1011
    %1077 = vmatprep.subr.bf16.mxu0 %v1014
    %1078 = vmatpush1.bf16.msra.mxu0 %v1013
    %1079 = vmatprep.subr.bf16.mxu0 %v1016
    %1080 = vmatpush1.bf16.msra.mxu0 %v1015
    %1081 = vmatprep.subr.bf16.mxu0 %v1018
    %1082 = vmatpush1.bf16.msra.mxu0 %v1017
    %1083 = vmatprep.subr.bf16.mxu0 %v1020
    %1084 = vmatpush1.bf16.msra.mxu0 %v1019
    %1085 = vmatprep.subr.bf16.mxu0 %v1022
    %1086 = vmatpush1.bf16.msra.mxu0 %v1021
    %1087 = vmatprep.subr.bf16.mxu0 %v1024
    %1088 = vmatpush1.bf16.msra.mxu0 %v1023
    %1089 = vmatprep.subr.bf16.mxu0 %v1026
    %1090 = vmatpush1.bf16.msra.mxu0 %v1025
    %1091 = vmatprep.subr.bf16.mxu0 %v1028
    %1092 = vmatpush1.bf16.msra.mxu0 %v1027
    %1093 = vmatprep.subr.bf16.mxu0 %v1030
    %1094 = vmatpush1.bf16.msra.mxu0 %v1029
    %1095 = vmatprep.subr.bf16.mxu0 %v1032
    %1096 = vmatpush1.bf16.msra.mxu0 %v1031
    %1097 = vmatprep.subr.bf16.mxu0 %v1034
    %1098 = vmatpush1.bf16.msra.mxu0 %v1033
    %1099 = vmatprep.subr.bf16.mxu0 %v1036
    %1100 = vmatpush1.bf16.msra.mxu0 %v1035
    %1101 = vmatprep.subr.bf16.mxu0 %v1038
    %1102 = vmatpush1.bf16.msra.mxu0 %v1037
    %1103 = vmatprep.mubr.bf16.mxu0 %v866
    %1104 = vmatmul.mubr.bf16.gmra.mrb[0].mxu0 %v865
    %v1105 = vpop.f32.mrb[0].mxu0
    %v1106 = vadd.f32 %v904, %v1105
    %v1107 = vpop.f32.mrb[0].mxu0
    %v1108 = vadd.f32 %v908, %v1107
    %v1109 = vpop.f32.mrb[0].mxu0
    %v1110 = vpop.f32.mrb[0].mxu0
    %1111 = vdwg.mxu0
    %v1112 = vmax.f32 %v1106, 0.0
    %v1113 = vmax.f32 %v1108, 0.0
    %v1114 = vpack.c.bf16 %v1112, %v1112
    %v1115 = vpack.c.bf16 %v1113, %v1113
    %v1116 = vld [vmem:[#allocation8] sm:$0xf]
    %v1117 = vld [vmem:[#allocation8 + $0x4] sm:$0xf]
    %v1118 = vld [vmem:[#allocation8 + $0x8] sm:$0xf]
    %v1119 = vld [vmem:[#allocation8 + $0xc] sm:$0xf]
    %v1120 = vld [vmem:[#allocation8 + $0x10] sm:$0xf]
    %v1121 = vld [vmem:[#allocation8 + $0x14] sm:$0xf]
    %v1122 = vld [vmem:[#allocation8 + $0x18] sm:$0xf]
    %v1123 = vld [vmem:[#allocation8 + $0x1c] sm:$0xf]
    %v1124 = vld [vmem:[#allocation8 + $0x20] sm:$0xf]
    %v1125 = vld [vmem:[#allocation8 + $0x24] sm:$0xf]
    %v1126 = vld [vmem:[#allocation8 + $0x28] sm:$0xf]
    %v1127 = vld [vmem:[#allocation8 + $0x2c] sm:$0xf]
    %v1128 = vld [vmem:[#allocation8 + $0x30] sm:$0xf]
    %v1129 = vld [vmem:[#allocation8 + $0x34] sm:$0xf]
    %v1130 = vld [vmem:[#allocation8 + $0x38] sm:$0xf]
    %v1131 = vld [vmem:[#allocation8 + $0x3c] sm:$0xf]
    %v1132 = vld [vmem:[#allocation8 + $0x40] sm:$0xf]
    %v1133 = vld [vmem:[#allocation8 + $0x44] sm:$0xf]
    %v1134 = vld [vmem:[#allocation8 + $0x48] sm:$0xf]
    %v1135 = vld [vmem:[#allocation8 + $0x4c] sm:$0xf]
    %v1136 = vld [vmem:[#allocation8 + $0x50] sm:$0xf]
    %v1137 = vld [vmem:[#allocation8 + $0x54] sm:$0xf]
    %v1138 = vld [vmem:[#allocation8 + $0x58] sm:$0xf]
    %v1139 = vld [vmem:[#allocation8 + $0x5c] sm:$0xf]
    %v1140 = vld [vmem:[#allocation8 + $0x60] sm:$0xf]
    %v1141 = vld [vmem:[#allocation8 + $0x64] sm:$0xf]
    %v1142 = vld [vmem:[#allocation8 + $0x68] sm:$0xf]
    %v1143 = vld [vmem:[#allocation8 + $0x6c] sm:$0xf]
    %v1144 = vld [vmem:[#allocation8 + $0x70] sm:$0xf]
    %v1145 = vld [vmem:[#allocation8 + $0x74] sm:$0xf]
    %v1146 = vld [vmem:[#allocation8 + $0x78] sm:$0xf]
    %v1147 = vld [vmem:[#allocation8 + $0x7c] sm:$0xf]
    %v1148 = vld [vmem:[%s6] sm:$0x1]
    %v1150 = vlaneseq
    %v1151 = vshrl.u32 %v1150, 7
    %v1152 = vsub.s32 0, %v1151
    %v1153 = vrot.slane %v1148, %v1152
    %v1187 = vunpack.c.l.b16 %v1116
    %v1188 = vunpack.c.l.b16 %v1117
    %v1189 = vunpack.c.l.b16 %v1118
    %v1190 = vunpack.c.l.b16 %v1119
    %v1191 = vunpack.c.l.b16 %v1120
    %v1192 = vunpack.c.l.b16 %v1121
    %v1193 = vunpack.c.l.b16 %v1122
    %v1194 = vunpack.c.l.b16 %v1123
    %v1195 = vunpack.c.l.b16 %v1124
    %v1196 = vunpack.c.l.b16 %v1125
    %v1197 = vunpack.c.l.b16 %v1126
    %v1198 = vunpack.c.l.b16 %v1127
    %v1199 = vunpack.c.l.b16 %v1128
    %v1200 = vunpack.c.l.b16 %v1129
    %v1201 = vunpack.c.l.b16 %v1130
    %v1202 = vunpack.c.l.b16 %v1131
    %v1203 = vunpack.c.l.b16 %v1132
    %v1204 = vunpack.c.l.b16 %v1133
    %v1205 = vunpack.c.l.b16 %v1134
    %v1206 = vunpack.c.l.b16 %v1135
    %v1207 = vunpack.c.l.b16 %v1136
    %v1208 = vunpack.c.l.b16 %v1137
    %v1209 = vunpack.c.l.b16 %v1138
    %v1210 = vunpack.c.l.b16 %v1139
    %v1211 = vunpack.c.l.b16 %v1140
    %v1212 = vunpack.c.l.b16 %v1141
    %v1213 = vunpack.c.l.b16 %v1142
    %v1214 = vunpack.c.l.b16 %v1143
    %v1215 = vunpack.c.l.b16 %v1144
    %v1216 = vunpack.c.l.b16 %v1145
    %v1217 = vunpack.c.l.b16 %v1146
    %v1218 = vunpack.c.l.b16 %v1147
    %v1219 = vpack.c.b16 %v1188, %v1187
    %v1220 = vpack.c.b16 %v1190, %v1189
    %v1221 = vpack.c.b16 %v1192, %v1191
    %v1222 = vpack.c.b16 %v1194, %v1193
    %v1223 = vpack.c.b16 %v1196, %v1195
    %v1224 = vpack.c.b16 %v1198, %v1197
    %v1225 = vpack.c.b16 %v1200, %v1199
    %v1226 = vpack.c.b16 %v1202, %v1201
    %v1227 = vpack.c.b16 %v1204, %v1203
    %v1228 = vpack.c.b16 %v1206, %v1205
    %v1229 = vpack.c.b16 %v1208, %v1207
    %v1230 = vpack.c.b16 %v1210, %v1209
    %v1231 = vpack.c.b16 %v1212, %v1211
    %v1232 = vpack.c.b16 %v1214, %v1213
    %v1233 = vpack.c.b16 %v1216, %v1215
    %v1234 = vpack.c.b16 %v1218, %v1217
    %1251 = vmatprep.subr.bf16.mxu0 0
    %1252 = vmatpush1.bf16.msra.mxu0 %v1219
    %1253 = vmatprep.subr.bf16.mxu0 0
    %1254 = vmatpush1.bf16.msra.mxu0 %v1220
    %1255 = vmatprep.subr.bf16.mxu0 0
    %1256 = vmatpush1.bf16.msra.mxu0 %v1221
    %1257 = vmatprep.subr.bf16.mxu0 0
    %1258 = vmatpush1.bf16.msra.mxu0 %v1222
    %1259 = vmatprep.subr.bf16.mxu0 0
    %1260 = vmatpush1.bf16.msra.mxu0 %v1223
    %1261 = vmatprep.subr.bf16.mxu0 0
    %1262 = vmatpush1.bf16.msra.mxu0 %v1224
    %1263 = vmatprep.subr.bf16.mxu0 0
    %1264 = vmatpush1.bf16.msra.mxu0 %v1225
    %1265 = vmatprep.subr.bf16.mxu0 0
    %1266 = vmatpush1.bf16.msra.mxu0 %v1226
    %1267 = vmatprep.subr.bf16.mxu0 0
    %1268 = vmatpush1.bf16.msra.mxu0 %v1227
    %1269 = vmatprep.subr.bf16.mxu0 0
    %1270 = vmatpush1.bf16.msra.mxu0 %v1228
    %1271 = vmatprep.subr.bf16.mxu0 0
    %1272 = vmatpush1.bf16.msra.mxu0 %v1229
    %1273 = vmatprep.subr.bf16.mxu0 0
    %1274 = vmatpush1.bf16.msra.mxu0 %v1230
    %1275 = vmatprep.subr.bf16.mxu0 0
    %1276 = vmatpush1.bf16.msra.mxu0 %v1231
    %1277 = vmatprep.subr.bf16.mxu0 0
    %1278 = vmatpush1.bf16.msra.mxu0 %v1232
    %1279 = vmatprep.subr.bf16.mxu0 0
    %1280 = vmatpush1.bf16.msra.mxu0 %v1233
    %1281 = vmatprep.subr.bf16.mxu0 0
    %1282 = vmatpush1.bf16.msra.mxu0 %v1234
    %1283 = vmatprep.mubr.bf16.mxu0 %v1115
    %1284 = vmatmul.mubr.bf16.gmra.mrb[0].mxu0 %v1114
    %v1285 = vpop.f32.mrb[0].mxu0
    %v1286 = vadd.f32 %v1153, %v1285
    %v1287 = vpop.f32.mrb[0].mxu0
    %v1288 = vpop.f32.mrb[0].mxu0
    %v1289 = vpop.f32.mrb[0].mxu0
    %1290 = vdwg.mxu0
    %v1291 = vxor.u32 %v1286, 2147483648
    %v1292 = vmul.f32 %v1291, 1.442695
    %v1293 = vpow.pop %v1292
    %v1294 = vadd.f32 %v1293, 1.0
    %v1295 = vrcp.pop %v1294
    %v1296 = vmul.f32 1.0, %v1295
    %v1297 = vpack.c.bf16 %v1296, %v1296
    %1298 = vst [vmem:[#allocation10] sm:$0xf] %v1297
    // Predicated region
    $region46: #{tpu_custom_call.1} parent=1 // pred_check
      _
    $region47: #{tpu_custom_call.1} parent=1 // pred_check_branch
      %1300 = sbr.rel (0) target = $region49
    $region48: #{tpu_custom_call.1} parent=1 // pred_region
      %s1302 = ssub.s32 64, 64
      %1303 = vsyncadd [#allocation4], %s1302
      %s1305 = sshll.u32 [#allocation10], 4
      %s1306 = int_to_ptr.vmem [resolvable:$true] %s1305
      %1308 = dma.vmem_to_hbm [thread:$0]  %s1306, 64, %s7, [#allocation4]
    $region49: #{tpu_custom_call.1} parent=1 // pred_fallthru
      _
    // Predicated region
    $region50: #{tpu_custom_call.1} parent=1 // pred_check
      _
    $region51: #{tpu_custom_call.1} parent=1 // pred_check_branch
      %1310 = sbr.rel (0) target = $region53
    $region52: #{tpu_custom_call.1} parent=1 // pred_region
      %1311 = dma.done [#allocation4], 64
    $region53: #{tpu_custom_call.1} parent=1 // pred_fallthru
      _
    %1312 = vsyncpa [#allocation3], 1
    %1313 = vsyncpa [#allocation6], 1
    %1314 = vsyncpa [#allocation9], 1
    %1315 = vsyncpa [#allocation4], 1

</llo_original>
